<compile_context>
chip_gen: v7x
topology: tpu7x:2x2x1
jax: 0.10.0
libtpu: 0.0.40
codegen_flags: <defaults>
</compile_context>

<pallas_src>
import functools

import jax
import jax.numpy as jnp
from jax.experimental import pallas as pl
from jax.experimental.pallas import tpu as pltpu


# ----------------------------- kernels --------------------------------------


def _dense_kernel_single_k(x_ref, w_ref, b_ref, o_ref):
    """K fits in one block: dot + bias straight to the output tile."""
    acc = jnp.dot(
        x_ref[...].astype(w_ref.dtype),
        w_ref[...],
        preferred_element_type=jnp.float32,
    )
    o_ref[...] = (acc + b_ref[...].astype(jnp.float32)).astype(o_ref.dtype)


def _dense_kernel_multi_k(x_ref, w_ref, b_ref, o_ref, acc_ref):
    """K is split across the innermost ('arbitrary') grid axis."""
    k = pl.program_id(2)

    @pl.when(k == 0)
    def _init():
        # Seed the accumulator with the bias so the epilogue is just a cast.
        acc_ref[...] = jnp.broadcast_to(
            b_ref[...].astype(jnp.float32), acc_ref.shape
        )

    acc_ref[...] += jnp.dot(
        x_ref[...].astype(w_ref.dtype),
        w_ref[...],
        preferred_element_type=jnp.float32,
    )

    @pl.when(k == pl.num_programs(2) - 1)
    def _epilogue():
        o_ref[...] = acc_ref[...].astype(o_ref.dtype)


# ----------------------------- helpers ---------------------------------------


def _round_up(a: int, m: int) -> int:
    return (a + m - 1) // m * m


def _pick_tile(padded_dim: int, unit: int, target: int) -> int:
    """Largest multiple of `unit` that divides `padded_dim` and is <= target."""
    target = max(unit, min(target, padded_dim))
    t = (target // unit) * unit
    while padded_dim % t != 0:
        t -= unit
    return t


def _auto_mxu_dtype(d_in: int, d_out: int, dtype):
    # bf16 MXU inputs (f32 accumulate) pay off on v6e/v7x for large layers;
    # keep small layers in f32 so tight numerics are preserved.
    if dtype == jnp.float32 and d_in * d_out >= 512 * 512:
        return jnp.bfloat16
    return dtype


def prepare_dense_params(w, b, *, mxu_dtype=None):
    """Pad/cast Linear parameters once, at load time (not per forward call).

    w: (D_in, D_out)  (transpose of torch's (out, in) weight)
    b: (D_out,)
    Returns (w_padded, b_padded, d_out) with lane/sublane-aligned shapes.
    """
    d_in, d_out = w.shape
    if mxu_dtype is None:
        mxu_dtype = _auto_mxu_dtype(d_in, d_out, w.dtype)
    kp = _round_up(d_in, 128)
    np_ = _round_up(d_out, 128)
    wp = jnp.pad(w, ((0, kp - d_in), (0, np_ - d_out))).astype(mxu_dtype)
    bp = jnp.pad(b, (0, np_ - d_out)).reshape(1, np_).astype(jnp.float32)
    return wp, bp, d_out


# ----------------------------- forward ---------------------------------------


@functools.partial(jax.jit, static_argnames=("d_out", "tm", "tn", "tk"))
def dense_forward(x, wp, bp, *, d_out, tm=None, tn=None, tk=None):
    """Computes Linear(x) then appends two singleton spatial dims.

    x:  (B, D_in)          activations (any float dtype; cast to W dtype in-kernel)
    wp: (Kp, Np)           pre-padded / pre-cast weight from prepare_dense_params
    bp: (1, Np)            pre-padded f32 bias
    returns: (B, d_out, 1, 1) in x.dtype
    """
    B, D_in = x.shape
    Kp, Np = wp.shape
    out_dtype = x.dtype

    Mp = _round_up(B, 8)

    # --- tile selection: divisors of the padded dims, big by default -------
    tm_ = _pick_tile(Mp, 8, tm if tm is not None else 512)
    tn_ = _pick_tile(Np, 128, tn if tn is not None else 512)

    # Guarantee >= 2 parallel (M,N) blocks when possible so both v7x
    # TensorCores get work.
    if (Mp // tm_) * (Np // tn_) < 2:
        if Np // 128 >= 2:
            tn_ = _pick_tile(Np, 128, Np // 2)
        elif Mp // 8 >= 2:
            tm_ = _pick_tile(Mp, 8, Mp // 2)

    # --- K tile: as large as the VMEM budget allows (fewer acc round-trips) --
    x_item = jnp.dtype(x.dtype).itemsize
    w_item = jnp.dtype(wp.dtype).itemsize
    o_item = jnp.dtype(out_dtype).itemsize
    VMEM_BUDGET = 24 * 1024 * 1024  # conservative across v5e/v6e/v7x
    fixed_bytes = tm_ * tn_ * 4 + 2 * tm_ * tn_ * o_item + 2 * tn_ * 4
    per_k_bytes = 2 * (tm_ * x_item + tn_ * w_item)  # double-buffered x & W
    tk_cap = max(128, ((VMEM_BUDGET - fixed_bytes) // per_k_bytes) // 128 * 128)
    tk_target = tk if tk is not None else min(Kp, 2048)
    tk_ = _pick_tile(Kp, 128, min(tk_target, tk_cap))
    nk = Kp // tk_

    working_set = fixed_bytes + per_k_bytes * tk_
    vmem_limit = int(min(max(2 * working_set, 32 * 1024 * 1024),
                         48 * 1024 * 1024))

    # Only the activations are padded per call (they change every step anyway).
    xp = jnp.pad(x, ((0, Mp - B), (0, Kp - D_in)))

    cost = pl.CostEstimate(
        flops=2 * Mp * Kp * Np,
        transcendentals=0,
        bytes_accessed=(
            Mp * Kp * x_item + Kp * Np * w_item + Np * 4 + Mp * Np * o_item
        ),
    )

    if nk == 1:
        y = pl.pallas_call(
            _dense_kernel_single_k,
            out_shape=jax.ShapeDtypeStruct((Mp, Np), out_dtype),
            grid_spec=pltpu.PrefetchScalarGridSpec(
                num_scalar_prefetch=0,
                grid=(Mp // tm_, Np // tn_),
                in_specs=[
                    pl.BlockSpec((tm_, tk_), lambda i, j: (i, 0)),
                    pl.BlockSpec((tk_, tn_), lambda i, j: (0, j)),
                    pl.BlockSpec((1, tn_), lambda i, j: (0, j)),
                ],
                out_specs=pl.BlockSpec((tm_, tn_), lambda i, j: (i, j)),
            ),
            compiler_params=pltpu.CompilerParams(
                dimension_semantics=("parallel", "parallel"),
                vmem_limit_bytes=vmem_limit,
            ),
            cost_estimate=cost,
        )(xp, wp, bp)
    else:
        y = pl.pallas_call(
            _dense_kernel_multi_k,
            out_shape=jax.ShapeDtypeStruct((Mp, Np), out_dtype),
            grid_spec=pltpu.PrefetchScalarGridSpec(
                num_scalar_prefetch=0,
                grid=(Mp // tm_, Np // tn_, nk),
                in_specs=[
                    pl.BlockSpec((tm_, tk_), lambda i, j, k: (i, k)),
                    pl.BlockSpec((tk_, tn_), lambda i, j, k: (k, j)),
                    pl.BlockSpec((1, tn_), lambda i, j, k: (0, j)),
                ],
                out_specs=pl.BlockSpec((tm_, tn_), lambda i, j, k: (i, j)),
                scratch_shapes=[pltpu.VMEM((tm_, tn_), jnp.float32)],
            ),
            compiler_params=pltpu.CompilerParams(
                dimension_semantics=("parallel", "parallel", "arbitrary"),
                vmem_limit_bytes=vmem_limit,
            ),
            cost_estimate=cost,
        )(xp, wp, bp)

    # Strip padding, then PyTorch's `self.dense(x)[..., None, None]`.
    y = y[:B, :d_out]
    return y[..., None, None]


# ----------------------------- test ------------------------------------------

if __name__ == "__main__":
    key = jax.random.PRNGKey(0)

    # --- Test 1: small shapes consistent with the module (single-K path) ----
    B, D_in, D_out = 2, 32, 32
    kx, kw, kb = jax.random.split(key, 3)
    x = jax.random.normal(kx, (B, D_in), dtype=jnp.float32)
    bound = 1.0 / jnp.sqrt(jnp.float32(D_in))
    w = jax.random.uniform(kw, (D_in, D_out), jnp.float32, -bound, bound)
    b = jax.random.uniform(kb, (D_out,), jnp.float32, -bound, bound)

    wp, bp, d_out = prepare_dense_params(w, b)
    out = jax.block_until_ready(dense_forward(x, wp, bp, d_out=d_out))
    ref = (x @ w + b)[..., None, None]
    assert out.shape == (B, D_out, 1, 1), out.shape
    assert jnp.allclose(out, ref, atol=1e-5, rtol=1e-5), float(
        jnp.max(jnp.abs(out - ref))
    )

    # --- Test 2: exercise the multi-K accumulator path (still small) --------
    B2, D_in2, D_out2 = 16, 256, 192
    k3, k4, k5 = jax.random.split(jax.random.PRNGKey(1), 3)
    x2 = jax.random.normal(k3, (B2, D_in2), dtype=jnp.float32)
    bound2 = 1.0 / jnp.sqrt(jnp.float32(D_in2))
    w2 = jax.random.uniform(k4, (D_in2, D_out2), jnp.float32, -bound2, bound2)
    b2 = jax.random.uniform(k5, (D_out2,), jnp.float32, -bound2, bound2)

    wp2, bp2, d_out2 = prepare_dense_params(w2, b2)
    out2 = jax.block_until_ready(
        dense_forward(x2, wp2, bp2, d_out=d_out2, tk=128)
    )
    ref2 = (x2 @ w2 + b2)[..., None, None]
    assert out2.shape == (B2, D_out2, 1, 1), out2.shape
    assert jnp.allclose(out2, ref2, atol=1e-4, rtol=1e-5), float(
        jnp.max(jnp.abs(out2 - ref2))
    )

    print("KERNEL_OK")
</pallas_src>

<mosaic_0001>
module attributes {stable_mosaic.version = 11 : i64} {
  func.func @_dense_kernel_single_k(%arg0: i32, %arg1: i32, %arg2: memref<8x128xf32, #tpu.memory_space<vmem>>, %arg3: memref<128x128xf32, #tpu.memory_space<vmem>>, %arg4: memref<1x128xf32, #tpu.memory_space<vmem>>, %arg5: memref<8x128xf32, #tpu.memory_space<vmem>>) attributes {dimension_semantics = [#tpu.dimension_semantics<parallel>, #tpu.dimension_semantics<parallel>], iteration_bounds = array<i64: 1, 1>, scalar_prefetch = 0 : i64, scratch_operands = 0 : i64, tpu.core_type = #tpu.core_type<tc>, window_params = [{transform_indices = @transform_0, window_bounds = array<i64: 8, 128>}, {transform_indices = @transform_1, window_bounds = array<i64: 128, 128>}, {transform_indices = @transform_2, window_bounds = array<i64: 1, 128>}, {transform_indices = @transform_3, window_bounds = array<i64: 8, 128>}]} {
    %c0 = arith.constant 0 : index
    %c0_0 = arith.constant 0 : index
    %0 = vector.load %arg2[%c0, %c0_0] : memref<8x128xf32, #tpu.memory_space<vmem>>, vector<8x128xf32>
    %c0_1 = arith.constant 0 : index
    %c0_2 = arith.constant 0 : index
    %1 = vector.load %arg3[%c0_1, %c0_2] : memref<128x128xf32, #tpu.memory_space<vmem>>, vector<128x128xf32>
    %cst = arith.constant dense<0.000000e+00> : vector<8x128xf32>
    %2 = tpu.matmul %0, %1, %cst {dimension_numbers = #tpu.dot_dimension_numbers<[1], [0], [0], [1], [0, 0, 1, 1], [], []>} : vector<8x128xf32>, vector<128x128xf32>, vector<8x128xf32> -> vector<8x128xf32>
    %c0_3 = arith.constant 0 : index
    %c0_4 = arith.constant 0 : index
    %3 = vector.load %arg4[%c0_3, %c0_4] : memref<1x128xf32, #tpu.memory_space<vmem>>, vector<1x128xf32>
    %4 = vector.broadcast %3 : vector<1x128xf32> to vector<8x128xf32>
    %5 = arith.addf %2, %4 : vector<8x128xf32>
    %c0_5 = arith.constant 0 : index
    %c0_6 = arith.constant 0 : index
    %6 = vector.load %arg5[%c0_5, %c0_6] : memref<8x128xf32, #tpu.memory_space<vmem>>, vector<8x128xf32>
    tpu.vector_store %arg5[%c0_5, %c0_6], %5 {strides = array<i32>} : memref<8x128xf32, #tpu.memory_space<vmem>>, vector<8x128xf32>,
    return
  }
  func.func @transform_0(%arg0: i32, %arg1: i32) -> (i32, i32) {
    %c0_i32 = arith.constant 0 : i32
    %c0_i32_0 = arith.constant 0 : i32
    return %arg0, %c0_i32 : i32, i32
  }
  func.func @transform_1(%arg0: i32, %arg1: i32) -> (i32, i32) {
    %c0_i32 = arith.constant 0 : i32
    %c0_i32_0 = arith.constant 0 : i32
    return %c0_i32, %arg1 : i32, i32
  }
  func.func @transform_2(%arg0: i32, %arg1: i32) -> (i32, i32) {
    %c0_i32 = arith.constant 0 : i32
    %c0_i32_0 = arith.constant 0 : i32
    return %c0_i32, %arg1 : i32, i32
  }
  func.func @transform_3(%arg0: i32, %arg1: i32) -> (i32, i32) {
    %c0_i32 = arith.constant 0 : i32
    return %arg0, %arg1 : i32, i32
  }
}

</mosaic_0001>

<llo_original>
// kernel: dense_forward.1
$region0: #{dense_forward.1}
  #allocation0 [shape = 'u32[]', space=smem, size = 0x4, offset = 0x4, fixed_abs, tag = 'smem constant byte address 0x4 - core index']
  #allocation1 [shape = 'u32[144,128]{1,0:T(1,128)}', space=vmem, size = 0x12000, scoped, tag = 'internal scratch']
  %s0 = inlined_call_operand.vmem [shape: f32[8,128], index: 0, kind: input, shape index: {}]
  %s1 = inlined_call_operand.hbm [shape: f32[128,128], index: 1, kind: input, shape index: {}]
  %s2 = inlined_call_operand.vmem [shape: f32[1,128], index: 2, kind: input, shape index: {}]
  %s3 = inlined_call_operand.vmem [shape: f32[8,128], index: 3, kind: output, shape index: {}]
  %s4 = sld [smem:[#allocation0]]
  $region26: #{dense_forward.1} parent=0
    _
  %s6 = ssub.s32 1, %s4
  %s7 = scalar_select 0, %s6, %s4
  $region1: #{dense_forward.1} parent=0
    #allocation2 [shape = 'u8[65536]{0}', space=vmem, size = 0x10000, scoped, tag = 'input window, operand 1, single buffered']
    #allocation3 [shape = 's32[1]{0}', space=sflag, size = 0x4, scoped, tag = 'scoped memory for dense_forward.1']
    %8 = vsyncpa [#allocation3], 0
    // Predicated region
    $region2: #{dense_forward.1} parent=1 // pred_check
      _
    $region3: #{dense_forward.1} parent=1 // pred_check_branch
      %10 = sbr.rel (0) target = $region5
    $region4: #{dense_forward.1} parent=1 // pred_region
      _
    $region5: #{dense_forward.1} parent=1 // pred_fallthru
      _
    // Predicated region
    $region6: #{dense_forward.1} parent=1 // pred_check
      _
    $region7: #{dense_forward.1} parent=1 // pred_check_branch
      %12 = sbr.rel (0) target = $region9
    $region8: #{dense_forward.1} parent=1 // pred_region
      %s14 = ssub.s32 2048, 2048
      %15 = vsyncadd [#allocation3], %s14
      %s16 = sshll.u32 [#allocation2], 4
      %s17 = int_to_ptr.vmem [resolvable:$true] %s16
      %22 = dma.hbm_to_vmem [thread:$0]  %s1, 2048, %s17, [#allocation3], 128, 128, 8
    $region9: #{dense_forward.1} parent=1 // pred_fallthru
      _
    // Predicated region
    $region10: #{dense_forward.1} parent=1 // pred_check
      _
    $region11: #{dense_forward.1} parent=1 // pred_check_branch
      %24 = sbr.rel (0) target = $region13
    $region12: #{dense_forward.1} parent=1 // pred_region
      _
    $region13: #{dense_forward.1} parent=1 // pred_fallthru
      _
    // Predicated region
    $region14: #{dense_forward.1} parent=1 // pred_check
      _
    $region15: #{dense_forward.1} parent=1 // pred_check_branch
      %26 = sbr.rel (0) target = $region17
    $region16: #{dense_forward.1} parent=1 // pred_region
      %27 = dma.done [#allocation3], 2048
    $region17: #{dense_forward.1} parent=1 // pred_fallthru
      _
    %v28 = vld [vmem:[%s0] sm:$0xff]
    %v29 = vld [vmem:[#allocation2] sm:$0xff]
    %v30 = vld [vmem:[#allocation2 + $0x8] sm:$0xff]
    %v31 = vld [vmem:[#allocation2 + $0x10] sm:$0xff]
    %v32 = vld [vmem:[#allocation2 + $0x18] sm:$0xff]
    %v33 = vld [vmem:[#allocation2 + $0x20] sm:$0xff]
    %v34 = vld [vmem:[#allocation2 + $0x28] sm:$0xff]
    %v35 = vld [vmem:[#allocation2 + $0x30] sm:$0xff]
    %v36 = vld [vmem:[#allocation2 + $0x38] sm:$0xff]
    %v37 = vld [vmem:[#allocation2 + $0x40] sm:$0xff]
    %v38 = vld [vmem:[#allocation2 + $0x48] sm:$0xff]
    %v39 = vld [vmem:[#allocation2 + $0x50] sm:$0xff]
    %v40 = vld [vmem:[#allocation2 + $0x58] sm:$0xff]
    %v41 = vld [vmem:[#allocation2 + $0x60] sm:$0xff]
    %v42 = vld [vmem:[#allocation2 + $0x68] sm:$0xff]
    %v43 = vld [vmem:[#allocation2 + $0x70] sm:$0xff]
    %v44 = vld [vmem:[#allocation2 + $0x78] sm:$0xff]
    %v45 = vld [vmem:[%s2] sm:$0x1]
    %v47 = vlaneseq
    %v48 = vshrl.u32 %v47, 7
    %v49 = vsub.s32 0, %v48
    %v50 = vrot.slane %v45, %v49
    %52 = vmatprep.subr.mxu0 0.0
    %53 = vmatpush1.msra.mxu0 %v29
    %54 = vmatprep.subr.mxu0 0.0
    %55 = vmatpush1.msra.mxu0 %v30
    %56 = vmatprep.subr.mxu0 0.0
    %57 = vmatpush1.msra.mxu0 %v31
    %58 = vmatprep.subr.mxu0 0.0
    %59 = vmatpush1.msra.mxu0 %v32
    %60 = vmatprep.subr.mxu0 0.0
    %61 = vmatpush1.msra.mxu0 %v33
    %62 = vmatprep.subr.mxu0 0.0
    %63 = vmatpush1.msra.mxu0 %v34
    %64 = vmatprep.subr.mxu0 0.0
    %65 = vmatpush1.msra.mxu0 %v35
    %66 = vmatprep.subr.mxu0 0.0
    %67 = vmatpush1.msra.mxu0 %v36
    %68 = vmatprep.subr.mxu0 0.0
    %69 = vmatpush1.msra.mxu0 %v37
    %70 = vmatprep.subr.mxu0 0.0
    %71 = vmatpush1.msra.mxu0 %v38
    %72 = vmatprep.subr.mxu0 0.0
    %73 = vmatpush1.msra.mxu0 %v39
    %74 = vmatprep.subr.mxu0 0.0
    %75 = vmatpush1.msra.mxu0 %v40
    %76 = vmatprep.subr.mxu0 0.0
    %77 = vmatpush1.msra.mxu0 %v41
    %78 = vmatprep.subr.mxu0 0.0
    %79 = vmatpush1.msra.mxu0 %v42
    %80 = vmatprep.subr.mxu0 0.0
    %81 = vmatpush1.msra.mxu0 %v43
    %82 = vmatprep.subr.mxu0 0.0
    %83 = vmatpush1.msra.mxu0 %v44
    %84 = vmatprep.subr.mxu0 0.0
    %85 = vmatpush1.msra.mxu0 0.0
    %86 = vmatprep.subr.mxu0 0.0
    %87 = vmatpush1.msra.mxu0 0.0
    %88 = vmatprep.subr.mxu0 0.0
    %89 = vmatpush1.msra.mxu0 0.0
    %90 = vmatprep.subr.mxu0 0.0
    %91 = vmatpush1.msra.mxu0 0.0
    %92 = vmatprep.subr.mxu0 0.0
    %93 = vmatpush1.msra.mxu0 0.0
    %94 = vmatprep.subr.mxu0 0.0
    %95 = vmatpush1.msra.mxu0 0.0
    %96 = vmatprep.subr.mxu0 0.0
    %97 = vmatpush1.msra.mxu0 0.0
    %98 = vmatprep.subr.mxu0 0.0
    %99 = vmatpush1.msra.mxu0 0.0
    %100 = vmatprep.subr.mxu0 0.0
    %101 = vmatpush1.msra.mxu0 0.0
    %102 = vmatprep.subr.mxu0 0.0
    %103 = vmatpush1.msra.mxu0 0.0
    %104 = vmatprep.subr.mxu0 0.0
    %105 = vmatpush1.msra.mxu0 0.0
    %106 = vmatprep.subr.mxu0 0.0
    %107 = vmatpush1.msra.mxu0 0.0
    %108 = vmatprep.subr.mxu0 0.0
    %109 = vmatpush1.msra.mxu0 0.0
    %110 = vmatprep.subr.mxu0 0.0
    %111 = vmatpush1.msra.mxu0 0.0
    %112 = vmatprep.subr.mxu0 0.0
    %113 = vmatpush1.msra.mxu0 0.0
    %114 = vmatprep.subr.mxu0 0.0
    %115 = vmatpush1.msra.mxu0 0.0
    %116 = vmatprep.mubr.f32.mxu0 0.0
    %117 = vmatmul.mubr.f32.gmra.mrb[0].mxu0 %v28
    %v118 = vpop.f32.mrb[0].mxu0
    %v119 = vadd.f32 %v50, %v118
    %v120 = vpop.f32.mrb[0].mxu0
    %121 = vdwg.mxu0
    %122 = vst [vmem:[%s3] sm:$0xff] %v119
    // Predicated region
    $region18: #{dense_forward.1} parent=1 // pred_check
      _
    $region19: #{dense_forward.1} parent=1 // pred_check_branch
      %124 = sbr.rel (0) target = $region21
    $region20: #{dense_forward.1} parent=1 // pred_region
      _
    $region21: #{dense_forward.1} parent=1 // pred_fallthru
      _
    // Predicated region
    $region22: #{dense_forward.1} parent=1 // pred_check
      _
    $region23: #{dense_forward.1} parent=1 // pred_check_branch
      %126 = sbr.rel (0) target = $region25
    $region24: #{dense_forward.1} parent=1 // pred_region
      _
    $region25: #{dense_forward.1} parent=1 // pred_fallthru
      _
    %127 = vsyncpa [#allocation3], 1

</llo_original>
